<compile_context>
chip_gen: v6e
topology: v6e:2x2x1
jax: 0.10.0
libtpu: 0.0.40
codegen_flags: <defaults>
</compile_context>

<pallas_src>
import math
import functools

import jax
import jax.numpy as jnp
from jax import lax
from jax.experimental import pallas as pl
from jax.experimental.pallas import tpu as pltpu


def _myloss_kernel(label_ref, lhs_ref, w_ref,          # inputs
                   out_ref, wl_ref,                    # outputs
                   lhsn_ref, min_ref,                  # VMEM scratch
                   *, s, cos_m, sin_m, th, mm, easy_margin,
                   c_actual, tc, b, mxu_dtype):
    """One grid step == one (tc, D) tile of the class/weight matrix.

    lhs_ref holds [x ; weight[label]] stacked along rows (2B, D); it is
    normalized in f32 (and cast to the MXU dtype) once at j == 0 and kept
    resident in lhsn_ref, so every tile needs exactly ONE MXU matmul producing
    both the x-vs-weight cosines and the weight[label]-vs-weight cosines.
    """
    j = pl.program_id(0)
    last = pl.num_programs(0) - 1

    @pl.when(j == 0)
    def _init():
        lf = lhs_ref[...].astype(jnp.float32)
        inv = lax.rsqrt(jnp.maximum(jnp.sum(lf * lf, axis=-1, keepdims=True),
                                    1e-24))
        lhsn_ref[...] = (lf * inv).astype(mxu_dtype)
        min_ref[...] = jnp.full((b, 1), 1000.0, jnp.float32)

    # Normalize the streamed (tc, D) weight tile.  Norm math stays in f32
    # (v5e has no bf16 VPU/EUP path); only the MXU operand is cast down.
    wf = w_ref[...].astype(jnp.float32)
    winv = lax.rsqrt(jnp.maximum(jnp.sum(wf * wf, axis=-1, keepdims=True),
                                 1e-24))
    wn = (wf * winv).astype(mxu_dtype)

    # Single fused matmul: rows [0, B) -> cosine(x, w); rows [B, 2B) ->
    # cosine(w[label], w).  Contract the feature dim of both operands so the
    # (tc, D) tile is consumed in place (no transpose materialized).
    both = lax.dot_general(lhsn_ref[...], wn, (((1,), (1,)), ((), ())),
                           preferred_element_type=jnp.float32)      # (2B, tc)
    cosine = both[:b]
    cos_ww = both[b:]

    sine = jnp.sqrt(jnp.clip(1.0 - cosine * cosine, 0.0, 1.0))
    phi = cosine * cos_m - sine * sin_m
    if easy_margin:
        phi = jnp.where(cosine > 0.0, phi, cosine)
    else:
        phi = jnp.where(cosine > th, phi, cosine - mm)

    lbl = label_ref[...]                                            # (B, 1) i32
    col = lax.broadcasted_iota(jnp.int32, cosine.shape, 1) + j * tc
    is_target = col == lbl
    out_ref[...] = jnp.where(is_target, phi, cosine) * s

    # Auxiliary weight loss: for unit vectors
    #   ||wn[label] - wn[c]||^2 = 2 - 2 * <wn[label], wn[c]>.
    # Self class masked by label index; columns past the true class count
    # (ragged last tile / garbage padded rows) masked as well.
    # TODO(synk): the reference masks *any* class whose dist == 0 (exact
    # duplicate weight rows), not only the label column.
    dist = 2.0 - 2.0 * cos_ww
    keep = (col < c_actual) & jnp.logical_not(is_target)
    masked = jnp.where(keep, dist, 1000.0)
    min_ref[...] = jnp.minimum(min_ref[...],
                               jnp.min(masked, axis=1, keepdims=True))

    @pl.when(j == last)
    def _finalize():
        wl_ref[...] = jnp.reshape(float(b) / jnp.sum(min_ref[...]), (1, 1))


def _pick_class_tile(c, d, itemsize, max_tile):
    """Largest lane-dense class tile whose streamed weight slab still
    multi-buffers comfortably in VMEM; small C collapses to one grid step."""
    budget = 8 * 1024 * 1024                          # bytes per streamed tile
    tc = min(int(max_tile), max(128, budget // max(1, d * itemsize)))
    tc = max(128, (tc // 128) * 128)                  # lane-dense logits store
    if c <= tc:
        return c, 1                                   # single step, no remainder
    return tc, -(-c // tc)                            # ragged last tile allowed


def my_loss(x, weight, label, *, s=30.0, m=0.5, easy_margin=False,
            class_tile=2048):
    """Forward pass of MyLoss. Returns (scaled logits (B, C), weight_loss ())."""
    B, D = x.shape
    C, D2 = weight.shape
    assert D == D2

    x = x.astype(jnp.float32)
    label = label.astype(jnp.int32)

    # Stream the weight matrix in its native dtype: bf16 weights feed the MXU
    # as bf16 (half the HBM bytes on the dominant stream); otherwise f32.
    if weight.dtype == jnp.bfloat16:
        w_stream, mxu_dtype = weight, jnp.bfloat16
    else:
        w_stream, mxu_dtype = weight.astype(jnp.float32), jnp.float32

    tc, n_tiles = _pick_class_tile(C, D, w_stream.dtype.itemsize, class_tile)

    # Rows of the weight selected by label (tiny (B, D) gather, tile-invariant)
    # stacked under x so the kernel does one fused matmul per weight tile.
    wlab = jnp.take(weight, label, axis=0).astype(jnp.float32)       # (B, D)
    lhs = jnp.concatenate([x, wlab], axis=0)                         # (2B, D)
    label_2d = label.reshape(B, 1)

    kernel = functools.partial(
        _myloss_kernel,
        s=float(s), cos_m=math.cos(m), sin_m=math.sin(m),
        th=math.cos(math.pi - m), mm=math.sin(math.pi - m) * m,
        easy_margin=bool(easy_margin), c_actual=C, tc=tc, b=B,
        mxu_dtype=mxu_dtype)

    # VMEM budget: streamed weight tile (multi-buffered) + logits tile +
    # resident lhs; clamped so the same budget is safe on v7x's 64 MiB VMEM.
    est = (3 * tc * D * w_stream.dtype.itemsize
           + 3 * B * tc * 4
           + 3 * 2 * B * D * 4
           + (2 << 20))
    vmem_limit = int(min(max(est, 32 * 1024 * 1024), 56 * 1024 * 1024))

    out, wl = pl.pallas_call(
        kernel,
        grid_spec=pltpu.PrefetchScalarGridSpec(
            num_scalar_prefetch=0,
            grid=(n_tiles,),
            in_specs=[
                pl.BlockSpec((B, 1), lambda j: (0, 0)),      # label (resident)
                pl.BlockSpec((2 * B, D), lambda j: (0, 0)),  # [x ; w[label]] (resident)
                pl.BlockSpec((tc, D), lambda j: (j, 0)),     # weight (streamed)
            ],
            out_specs=(
                pl.BlockSpec((B, tc), lambda j: (0, j)),     # scaled logits tile
                pl.BlockSpec((1, 1), lambda j: (0, 0)),      # weight_loss scalar
            ),
            scratch_shapes=[
                pltpu.VMEM((2 * B, D), mxu_dtype),           # normalized [x; w[label]]
                pltpu.VMEM((B, 1), jnp.float32),             # running min dist
            ]),
        out_shape=(
            jax.ShapeDtypeStruct((B, C), jnp.float32),
            jax.ShapeDtypeStruct((1, 1), jnp.float32),
        ),
        compiler_params=pltpu.CompilerParams(
            # Class axis carries the running-min / resident-lhs state -> arbitrary.
            # TODO(synk): for v7x megacore, emit per-tile partial mins as an
            # extra output (and re-normalize lhs per tile) so this axis can be
            # marked "parallel"; no benefit on single-TC v5e/v6e.
            dimension_semantics=("arbitrary",),
            vmem_limit_bytes=vmem_limit,
        ),
    )(label_2d, lhs, w_stream)

    return out, wl[0, 0]


def xavier_uniform(key, out_features, in_features):
    # matches nn.init.xavier_uniform_ on a (out, in) matrix, gain=1
    bound = math.sqrt(6.0 / (in_features + out_features))
    return jax.random.uniform(
        key, (out_features, in_features), dtype=jnp.float32,
        minval=-bound, maxval=bound)


def _reference(x, weight, label, *, s, m, easy_margin):
    """Pure-JAX f32 port of the PyTorch module, for correctness checking."""
    cos_m, sin_m = math.cos(m), math.sin(m)
    th, mm = math.cos(math.pi - m), math.sin(math.pi - m) * m
    xn = x / jnp.maximum(jnp.linalg.norm(x, axis=1, keepdims=True), 1e-12)
    wn = weight / jnp.maximum(jnp.linalg.norm(weight, axis=1, keepdims=True), 1e-12)
    cosine = xn @ wn.T
    sine = jnp.sqrt(jnp.clip(1.0 - cosine * cosine, 0.0, 1.0))
    phi = cosine * cos_m - sine * sin_m
    if easy_margin:
        phi = jnp.where(cosine > 0.0, phi, cosine)
    else:
        phi = jnp.where(cosine > th, phi, cosine - mm)
    one_hot = jax.nn.one_hot(label, weight.shape[0], dtype=jnp.float32)
    out = (one_hot * phi + (1.0 - one_hot) * cosine) * s
    w_label = wn[label]
    dist = jnp.sum((w_label[:, None, :] - wn[None, :, :]) ** 2, axis=-1)
    values = jnp.where(dist == 0.0, 1000.0, dist)
    wl = label.shape[0] / jnp.sum(jnp.min(values, axis=1))
    return out, wl


if __name__ == "__main__":
    B, D = 8, 128
    key = jax.random.PRNGKey(0)

    # (C, class_tile, weight dtype, easy_margin, atol_out, rtol_out, tol_wl)
    cases = [
        (256, 2048, jnp.float32,  False, 2e-3, 2e-3, 2e-3),   # f32, single fused tile
        (256, 2048, jnp.bfloat16, False, 0.25, 3e-2, 4e-2),   # bf16 weight streaming
        (200, 128,  jnp.bfloat16, False, 0.25, 3e-2, 4e-2),   # multi-tile + ragged last
        (256, 2048, jnp.float32,  True,  2e-3, 2e-3, 2e-3),   # easy-margin branch
    ]

    for idx, (C, ct, wdt, em, atol_o, rtol_o, tol_wl) in enumerate(cases):
        kx, kw, kl = jax.random.split(jax.random.fold_in(key, idx), 3)
        x = jax.random.normal(kx, (B, D), dtype=jnp.float32)
        weight = xavier_uniform(kw, C, D)
        label = jax.random.randint(kl, (B,), 0, C, dtype=jnp.int32)

        output, weight_loss = my_loss(x, weight.astype(wdt), label,
                                      s=30.0, m=0.5, easy_margin=em,
                                      class_tile=ct)
        jax.block_until_ready((output, weight_loss))

        assert output.shape == (B, C)
        assert weight_loss.shape == ()

        ref_out, ref_wl = _reference(x, weight, label, s=30.0, m=0.5,
                                     easy_margin=em)
        assert bool(jnp.allclose(output, ref_out, atol=atol_o, rtol=rtol_o)), \
            f"logits mismatch in case {idx}"
        assert bool(jnp.allclose(weight_loss, ref_wl, atol=tol_wl, rtol=tol_wl)), \
            f"weight_loss mismatch in case {idx}"

    print("KERNEL_OK")
</pallas_src>

<mosaic_0001>
module attributes {stable_mosaic.version = 11 : i64} {
  func.func @_myloss_kernel(%arg0: i32, %arg1: memref<8x1xi32, #tpu.memory_space<vmem>>, %arg2: memref<16x128xf32, #tpu.memory_space<vmem>>, %arg3: memref<256x128xf32, #tpu.memory_space<vmem>>, %arg4: memref<8x256xf32, #tpu.memory_space<vmem>>, %arg5: memref<1x1xf32, #tpu.memory_space<vmem>>, %arg6: memref<16x128xf32, #tpu.memory_space<vmem>>, %arg7: memref<8x1xf32, #tpu.memory_space<vmem>>) attributes {dimension_semantics = [#tpu.dimension_semantics<arbitrary>], iteration_bounds = array<i64: 1>, scalar_prefetch = 0 : i64, scratch_operands = 2 : i64, tpu.core_type = #tpu.core_type<tc>, window_params = [{pipeline_mode = #tpu.pipeline_mode<synchronous>, transform_indices = @transform_0, window_bounds = array<i64: 8, 1>}, {pipeline_mode = #tpu.pipeline_mode<synchronous>, transform_indices = @transform_1, window_bounds = array<i64: 16, 128>}, {transform_indices = @transform_2, window_bounds = array<i64: 256, 128>}, {transform_indices = @transform_3, window_bounds = array<i64: 8, 256>}, {pipeline_mode = #tpu.pipeline_mode<synchronous>, transform_indices = @transform_4, window_bounds = array<i64: 1, 1>}]} {
    %c0_i32 = arith.constant 0 : i32
    %0 = arith.cmpi eq, %arg0, %c0_i32 : i32
    %1 = arith.extui %0 : i1 to i32
    %c0_i32_0 = arith.constant 0 : i32
    %2 = arith.cmpi ne, %1, %c0_i32_0 : i32
    scf.if %2 {
      %c0_30 = arith.constant 0 : index
      %c0_31 = arith.constant 0 : index
      %63 = vector.load %arg2[%c0_30, %c0_31] : memref<16x128xf32, #tpu.memory_space<vmem>>, vector<16x128xf32>
      %64 = arith.mulf %63, %63 : vector<16x128xf32>
      %cst_32 = arith.constant dense<0.000000e+00> : vector<16xf32>
      %65 = vector.multi_reduction <add>, %64, %cst_32 [1] : vector<16x128xf32> to vector<16xf32>
      %66 = vector.shape_cast %65 : vector<16xf32> to vector<16x1xf32>
      %cst_33 = arith.constant 1.000000e-24 : f32
      %67 = vector.broadcast %cst_33 : f32 to vector<16x1xf32>
      %68 = arith.maximumf %66, %67 : vector<16x1xf32>
      %69 = math.rsqrt %68 : vector<16x1xf32>
      %70 = vector.broadcast %69 : vector<16x1xf32> to vector<16x128xf32>
      %71 = arith.mulf %63, %70 : vector<16x128xf32>
      %c0_34 = arith.constant 0 : index
      %c0_35 = arith.constant 0 : index
      %72 = vector.load %arg6[%c0_34, %c0_35] : memref<16x128xf32, #tpu.memory_space<vmem>>, vector<16x128xf32>
      tpu.vector_store %arg6[%c0_34, %c0_35], %71 {strides = array<i32>} : memref<16x128xf32, #tpu.memory_space<vmem>>, vector<16x128xf32>,
      %cst_36 = arith.constant 1.000000e+03 : f32
      %73 = vector.broadcast %cst_36 : f32 to vector<8x1xf32>
      %c0_37 = arith.constant 0 : index
      %c0_38 = arith.constant 0 : index
      %74 = vector.load %arg7[%c0_37, %c0_38] : memref<8x1xf32, #tpu.memory_space<vmem>>, vector<8x1xf32>
      tpu.vector_store %arg7[%c0_37, %c0_38], %73 {strides = array<i32>} : memref<8x1xf32, #tpu.memory_space<vmem>>, vector<8x1xf32>,
    } else {
    }
    %c0 = arith.constant 0 : index
    %c0_1 = arith.constant 0 : index
    %3 = vector.load %arg3[%c0, %c0_1] : memref<256x128xf32, #tpu.memory_space<vmem>>, vector<256x128xf32>
    %4 = arith.mulf %3, %3 : vector<256x128xf32>
    %cst = arith.constant dense<0.000000e+00> : vector<256xf32>
    %5 = vector.multi_reduction <add>, %4, %cst [1] : vector<256x128xf32> to vector<256xf32>
    %6 = vector.shape_cast %5 : vector<256xf32> to vector<256x1xf32>
    %cst_2 = arith.constant 1.000000e-24 : f32
    %7 = vector.broadcast %cst_2 : f32 to vector<256x1xf32>
    %8 = arith.maximumf %6, %7 : vector<256x1xf32>
    %9 = math.rsqrt %8 : vector<256x1xf32>
    %10 = vector.broadcast %9 : vector<256x1xf32> to vector<256x128xf32>
    %11 = arith.mulf %3, %10 : vector<256x128xf32>
    %c0_3 = arith.constant 0 : index
    %c0_4 = arith.constant 0 : index
    %12 = vector.load %arg6[%c0_3, %c0_4] : memref<16x128xf32, #tpu.memory_space<vmem>>, vector<16x128xf32>
    %cst_5 = arith.constant dense<0.000000e+00> : vector<16x256xf32>
    %13 = tpu.matmul %12, %11, %cst_5 {dimension_numbers = #tpu.dot_dimension_numbers<[1], [1], [0], [0], [0, 0, 1, 0], [], []>} : vector<16x128xf32>, vector<256x128xf32>, vector<16x256xf32> -> vector<16x256xf32>
    %14 = vector.extract_strided_slice %13 {offsets = [0, 0], sizes = [8, 256], strides = [1, 1]} : vector<16x256xf32> to vector<8x256xf32>
    %15 = vector.extract_strided_slice %13 {offsets = [8, 0], sizes = [8, 256], strides = [1, 1]} : vector<16x256xf32> to vector<8x256xf32>
    %16 = arith.mulf %14, %14 : vector<8x256xf32>
    %cst_6 = arith.constant 1.000000e+00 : f32
    %17 = vector.broadcast %cst_6 : f32 to vector<8x256xf32>
    %18 = arith.subf %17, %16 : vector<8x256xf32>
    %cst_7 = arith.constant 0.000000e+00 : f32
    %cst_8 = arith.constant 1.000000e+00 : f32
    %19 = vector.broadcast %cst_7 : f32 to vector<8x256xf32>
    %20 = arith.maximumf %19, %18 : vector<8x256xf32>
    %21 = vector.broadcast %cst_8 : f32 to vector<8x256xf32>
    %22 = arith.minimumf %21, %20 : vector<8x256xf32>
    %23 = math.sqrt %22 : vector<8x256xf32>
    %cst_9 = arith.constant 0.87758255 : f32
    %24 = vector.broadcast %cst_9 : f32 to vector<8x256xf32>
    %25 = arith.mulf %14, %24 : vector<8x256xf32>
    %cst_10 = arith.constant 0.47942555 : f32
    %26 = vector.broadcast %cst_10 : f32 to vector<8x256xf32>
    %27 = arith.mulf %23, %26 : vector<8x256xf32>
    %28 = arith.subf %25, %27 : vector<8x256xf32>
    %cst_11 = arith.constant -0.87758255 : f32
    %29 = vector.broadcast %cst_11 : f32 to vector<8x256xf32>
    %30 = arith.cmpf ogt, %14, %29 : vector<8x256xf32>
    %cst_12 = arith.constant 0.239712775 : f32
    %31 = vector.broadcast %cst_12 : f32 to vector<8x256xf32>
    %32 = arith.subf %14, %31 : vector<8x256xf32>
    %33 = arith.select %30, %28, %32 : vector<8x256xi1>, vector<8x256xf32>
    %c0_13 = arith.constant 0 : index
    %c0_14 = arith.constant 0 : index
    %34 = vector.load %arg1[%c0_13, %c0_14] : memref<8x1xi32, #tpu.memory_space<vmem>>, vector<8x1xi32>
    %35 = tpu.iota {dimensions = array<i32: 1>} : vector<8x256xi32>
    %c256_i32 = arith.constant 256 : i32
    %36 = arith.muli %arg0, %c256_i32 : i32
    %37 = vector.broadcast %36 : i32 to vector<8x256xi32>
    %38 = arith.addi %35, %37 : vector<8x256xi32>
    %39 = vector.broadcast %34 : vector<8x1xi32> to vector<8x256xi32>
    %40 = arith.cmpi eq, %38, %39 : vector<8x256xi32>
    %41 = arith.select %40, %33, %14 : vector<8x256xi1>, vector<8x256xf32>
    %cst_15 = arith.constant 3.000000e+01 : f32
    %42 = vector.broadcast %cst_15 : f32 to vector<8x256xf32>
    %43 = arith.mulf %41, %42 : vector<8x256xf32>
    %c0_16 = arith.constant 0 : index
    %c0_17 = arith.constant 0 : index
    %44 = vector.load %arg4[%c0_16, %c0_17] : memref<8x256xf32, #tpu.memory_space<vmem>>, vector<8x256xf32>
    tpu.vector_store %arg4[%c0_16, %c0_17], %43 {strides = array<i32>} : memref<8x256xf32, #tpu.memory_space<vmem>>, vector<8x256xf32>,
    %cst_18 = arith.constant 2.000000e+00 : f32
    %45 = vector.broadcast %cst_18 : f32 to vector<8x256xf32>
    %46 = arith.mulf %45, %15 : vector<8x256xf32>
    %cst_19 = arith.constant 2.000000e+00 : f32
    %47 = vector.broadcast %cst_19 : f32 to vector<8x256xf32>
    %48 = arith.subf %47, %46 : vector<8x256xf32>
    %c256_i32_20 = arith.constant 256 : i32
    %49 = vector.broadcast %c256_i32_20 : i32 to vector<8x256xi32>
    %50 = arith.cmpi slt, %38, %49 : vector<8x256xi32>
    %cst_21 = arith.constant dense<true> : vector<8x256xi1>
    %51 = arith.xori %40, %cst_21 : vector<8x256xi1>
    %52 = arith.andi %50, %51 : vector<8x256xi1>
    %cst_22 = arith.constant 1.000000e+03 : f32
    %53 = vector.broadcast %cst_22 : f32 to vector<8x256xf32>
    %54 = arith.select %52, %48, %53 : vector<8x256xi1>, vector<8x256xf32>
    %c0_23 = arith.constant 0 : index
    %c0_24 = arith.constant 0 : index
    %55 = vector.load %arg7[%c0_23, %c0_24] : memref<8x1xf32, #tpu.memory_space<vmem>>, vector<8x1xf32>
    %cst_25 = arith.constant dense<0x7F800000> : vector<8xf32>
    %56 = vector.multi_reduction <minimumf>, %54, %cst_25 [1] : vector<8x256xf32> to vector<8xf32>
    %57 = vector.shape_cast %56 : vector<8xf32> to vector<8x1xf32>
    %58 = arith.minimumf %55, %57 : vector<8x1xf32>
    %c0_26 = arith.constant 0 : index
    %c0_27 = arith.constant 0 : index
    %59 = vector.load %arg7[%c0_26, %c0_27] : memref<8x1xf32, #tpu.memory_space<vmem>>, vector<8x1xf32>
    tpu.vector_store %arg7[%c0_26, %c0_27], %58 {strides = array<i32>} : memref<8x1xf32, #tpu.memory_space<vmem>>, vector<8x1xf32>,
    %c0_i32_28 = arith.constant 0 : i32
    %60 = arith.cmpi eq, %arg0, %c0_i32_28 : i32
    %61 = arith.extui %60 : i1 to i32
    %c0_i32_29 = arith.constant 0 : i32
    %62 = arith.cmpi ne, %61, %c0_i32_29 : i32
    scf.if %62 {
      %c0_30 = arith.constant 0 : index
      %c0_31 = arith.constant 0 : index
      %63 = vector.load %arg7[%c0_30, %c0_31] : memref<8x1xf32, #tpu.memory_space<vmem>>, vector<8x1xf32>
      %64 = vector.shape_cast %63 : vector<8x1xf32> to vector<1x8x1xf32>
      %cst_32 = arith.constant dense<0.000000e+00> : vector<1xf32>
      %65 = vector.multi_reduction <add>, %64, %cst_32 [1, 2] : vector<1x8x1xf32> to vector<1xf32>
      %66 = vector.shape_cast %65 : vector<1xf32> to vector<1x1x1xf32>
      %67 = vector.extract %66[0, 0, 0] : f32 from vector<1x1x1xf32>
      %cst_33 = arith.constant 8.000000e+00 : f32
      %68 = arith.divf %cst_33, %67 : f32
      %69 = vector.broadcast %68 : f32 to vector<1x1xf32>
      %c0_34 = arith.constant 0 : index
      %c0_35 = arith.constant 0 : index
      %70 = vector.load %arg5[%c0_34, %c0_35] : memref<1x1xf32, #tpu.memory_space<vmem>>, vector<1x1xf32>
      tpu.vector_store %arg5[%c0_34, %c0_35], %69 {strides = array<i32>} : memref<1x1xf32, #tpu.memory_space<vmem>>, vector<1x1xf32>,
    } else {
    }
    return
  }
  func.func @transform_0(%arg0: i32) -> (i32, i32) {
    %c0_i32 = arith.constant 0 : i32
    %c0_i32_0 = arith.constant 0 : i32
    %c0_i32_1 = arith.constant 0 : i32
    return %c0_i32, %c0_i32_0 : i32, i32
  }
  func.func @transform_1(%arg0: i32) -> (i32, i32) {
    %c0_i32 = arith.constant 0 : i32
    %c0_i32_0 = arith.constant 0 : i32
    %c0_i32_1 = arith.constant 0 : i32
    return %c0_i32, %c0_i32_0 : i32, i32
  }
  func.func @transform_2(%arg0: i32) -> (i32, i32) {
    %c0_i32 = arith.constant 0 : i32
    %c0_i32_0 = arith.constant 0 : i32
    return %arg0, %c0_i32 : i32, i32
  }
  func.func @transform_3(%arg0: i32) -> (i32, i32) {
    %c0_i32 = arith.constant 0 : i32
    %c0_i32_0 = arith.constant 0 : i32
    return %c0_i32, %arg0 : i32, i32
  }
  func.func @transform_4(%arg0: i32) -> (i32, i32) {
    %c0_i32 = arith.constant 0 : i32
    %c0_i32_0 = arith.constant 0 : i32
    %c0_i32_1 = arith.constant 0 : i32
    return %c0_i32, %c0_i32_0 : i32, i32
  }
}

</mosaic_0001>

<llo_original>
// kernel: tpu_custom_call.1
$region0: #{tpu_custom_call.1}
  #allocation0 [shape = 'u32[]', space=smem, size = 0x4, offset = 0x4, fixed_abs, tag = 'smem constant byte address 0x4 - core index']
  #allocation1 [shape = 'u32[144,128]{1,0:T(1,128)}', space=vmem, size = 0x12000, scoped, tag = 'internal scratch']
  #allocation2 [shape = 'f32[16,128]{1,0:T(8,128)}', space=vmem, size = 0x2000, scoped, tag = 'scratch operand']
  #allocation3 [shape = 'f32[8,1]{1,0:T(8,128)}', space=vmem, size = 0x1000, scoped, tag = 'scratch operand']
  %s0 = inlined_call_operand.vmem [shape: s32[8,1], index: 0, kind: input, shape index: {}]
  %s1 = inlined_call_operand.hbm [shape: f32[16,128], index: 1, kind: input, shape index: {}]
  %s2 = inlined_call_operand.hbm [shape: f32[256,128], index: 2, kind: input, shape index: {}]
  %s3 = inlined_call_operand.hbm [shape: f32[8,256], index: 3, kind: output, shape index: {0}]
  %s4 = inlined_call_operand.hbm [shape: f32[1,1], index: 4, kind: output, shape index: {1}]
  %5 = xla_tuple %s3, %s4
  %s6 = sld [smem:[#allocation0]]
  $region46: #{tpu_custom_call.1} parent=0
    _
  %s8 = ssub.s32 1, %s6
  %s9 = scalar_select 0, %s8, %s6
  $region1: #{tpu_custom_call.1} parent=0
    #allocation4 [shape = 'u8[8192]{0}', space=vmem, size = 0x2000, scoped, tag = 'input window, operand 1, single buffered']
    #allocation5 [shape = 's32[1]{0}', space=sflag, size = 0x4, scoped, tag = 'scoped memory for tpu_custom_call.1']
    #allocation6 [shape = 's32[1]{0}', space=sflag, size = 0x4, scoped, tag = 'scoped memory for tpu_custom_call.1']
    #allocation7 [shape = 'u8[131072]{0}', space=vmem, size = 0x20000, scoped, tag = 'input window, operand 2, single buffered']
    #allocation8 [shape = 's32[1]{0}', space=sflag, size = 0x4, scoped, tag = 'scoped memory for tpu_custom_call.1']
    #allocation9 [shape = 'u8[8192]{0}', space=vmem, size = 0x2000, scoped, tag = 'output window, operand 0, single buffered']
    #allocation10 [shape = 'u8[512]{0}', space=vmem, size = 0x400, scoped, tag = 'output window, operand 1, single buffered']
    #allocation11 [shape = 's32[1]{0}', space=sflag, size = 0x4, scoped, tag = 'scoped memory for tpu_custom_call.1']
    %10 = vsyncpa [#allocation5], 0
    %11 = vsyncpa [#allocation8], 0
    %12 = vsyncpa [#allocation6], 0
    %13 = vsyncpa [#allocation11], 0
    // Predicated region
    $region2: #{tpu_custom_call.1} parent=1 // pred_check
      _
    $region3: #{tpu_custom_call.1} parent=1 // pred_check_branch
      %15 = sbr.rel (0) target = $region5
    $region4: #{tpu_custom_call.1} parent=1 // pred_region
      _
    $region5: #{tpu_custom_call.1} parent=1 // pred_fallthru
      _
    // Predicated region
    $region6: #{tpu_custom_call.1} parent=1 // pred_check
      _
    $region7: #{tpu_custom_call.1} parent=1 // pred_check_branch
      %17 = sbr.rel (0) target = $region9
    $region8: #{tpu_custom_call.1} parent=1 // pred_region
      %s19 = ssub.s32 256, 256
      %20 = vsyncadd [#allocation5], %s19
      %s21 = sshll.u32 [#allocation4], 4
      %s22 = int_to_ptr.vmem [resolvable:$true] %s21
      %27 = dma.hbm_to_vmem [thread:$0]  %s1, 256, %s22, [#allocation5], 128, 128, 8
    $region9: #{tpu_custom_call.1} parent=1 // pred_fallthru
      _
    // Predicated region
    $region10: #{tpu_custom_call.1} parent=1 // pred_check
      _
    $region11: #{tpu_custom_call.1} parent=1 // pred_check_branch
      %29 = sbr.rel (0) target = $region13
    $region12: #{tpu_custom_call.1} parent=1 // pred_region
      %s31 = ssub.s32 4096, 4096
      %32 = vsyncadd [#allocation8], %s31
      %s33 = sshll.u32 [#allocation7], 4
      %s34 = int_to_ptr.vmem [resolvable:$true] %s33
      %39 = dma.hbm_to_vmem [thread:$0]  %s2, 4096, %s34, [#allocation8], 128, 128, 8
    $region13: #{tpu_custom_call.1} parent=1 // pred_fallthru
      _
    // Predicated region
    $region14: #{tpu_custom_call.1} parent=1 // pred_check
      _
    $region15: #{tpu_custom_call.1} parent=1 // pred_check_branch
      %41 = sbr.rel (0) target = $region17
    $region16: #{tpu_custom_call.1} parent=1 // pred_region
      %42 = dma.done [#allocation5], 256
    $region17: #{tpu_custom_call.1} parent=1 // pred_fallthru
      _
    // Predicated region
    $region18: #{tpu_custom_call.1} parent=1 // pred_check
      _
    $region19: #{tpu_custom_call.1} parent=1 // pred_check_branch
      %44 = sbr.rel (0) target = $region21
    $region20: #{tpu_custom_call.1} parent=1 // pred_region
      %45 = dma.done [#allocation8], 4096
    $region21: #{tpu_custom_call.1} parent=1 // pred_fallthru
      _
    %p46 = scmp.eq.s32.totalorder 0, 0
    // Predicated region
    $region22: #{tpu_custom_call.1} parent=1 // pred_check
      %p47 = pneg %p46
    $region23: #{tpu_custom_call.1} parent=1 // pred_check_branch
      %49 = sbr.rel (%p47) target = $region25
    $region24: #{tpu_custom_call.1} parent=1 // pred_region
      %v50 = vld [vmem:[#allocation4] sm:$0xff]
      %v51 = vld [vmem:[#allocation4 + $0x8] sm:$0xff]
      %v52 = vmul.f32 %v50, %v50
      %v53 = vmul.f32 %v51, %v51
      %54 = vadd.xlane.f32.xlu0 %v52
      %v55 = vpop.xlane.xlu0 %54
      %56 = vadd.xlane.f32.xlu0 %v53
      %v57 = vpop.xlane.xlu0 %56
      %v58 = vmax.f32 %v55, 1e-24
      %v59 = vmax.f32 %v57, 1e-24
      %v60 = vrsqrt.pop %v58
      %v61 = vrsqrt.pop %v59
      %v62 = vmul.f32 %v50, %v60
      %v63 = vmul.f32 %v51, %v61
      %64 = vst [vmem:[#allocation2] sm:$0xff] %v62
      %65 = vst [vmem:[#allocation2 + $0x8] sm:$0xff] %v63
      %vm66 = vcmask 7168
      %67 = vst.msk [vmem:[#allocation3] sm:$0xff] %vm66, 1000.0
    $region25: #{tpu_custom_call.1} parent=1 // pred_fallthru
      _
    %v68 = vld [vmem:[#allocation7] sm:$0xff]
    %v69 = vld [vmem:[#allocation7 + $0x8] sm:$0xff]
    %v70 = vld [vmem:[#allocation7 + $0x10] sm:$0xff]
    %v71 = vld [vmem:[#allocation7 + $0x18] sm:$0xff]
    %v72 = vld [vmem:[#allocation7 + $0x20] sm:$0xff]
    %v73 = vld [vmem:[#allocation7 + $0x28] sm:$0xff]
    %v74 = vld [vmem:[#allocation7 + $0x30] sm:$0xff]
    %v75 = vld [vmem:[#allocation7 + $0x38] sm:$0xff]
    %v76 = vld [vmem:[#allocation7 + $0x40] sm:$0xff]
    %v77 = vld [vmem:[#allocation7 + $0x48] sm:$0xff]
    %v78 = vld [vmem:[#allocation7 + $0x50] sm:$0xff]
    %v79 = vld [vmem:[#allocation7 + $0x58] sm:$0xff]
    %v80 = vld [vmem:[#allocation7 + $0x60] sm:$0xff]
    %v81 = vld [vmem:[#allocation7 + $0x68] sm:$0xff]
    %v82 = vld [vmem:[#allocation7 + $0x70] sm:$0xff]
    %v83 = vld [vmem:[#allocation7 + $0x78] sm:$0xff]
    %v84 = vld [vmem:[#allocation7 + $0x80] sm:$0xff]
    %v85 = vld [vmem:[#allocation7 + $0x88] sm:$0xff]
    %v86 = vld [vmem:[#allocation7 + $0x90] sm:$0xff]
    %v87 = vld [vmem:[#allocation7 + $0x98] sm:$0xff]
    %v88 = vld [vmem:[#allocation7 + $0xa0] sm:$0xff]
    %v89 = vld [vmem:[#allocation7 + $0xa8] sm:$0xff]
    %v90 = vld [vmem:[#allocation7 + $0xb0] sm:$0xff]
    %v91 = vld [vmem:[#allocation7 + $0xb8] sm:$0xff]
    %v92 = vld [vmem:[#allocation7 + $0xc0] sm:$0xff]
    %v93 = vld [vmem:[#allocation7 + $0xc8] sm:$0xff]
    %v94 = vld [vmem:[#allocation7 + $0xd0] sm:$0xff]
    %v95 = vld [vmem:[#allocation7 + $0xd8] sm:$0xff]
    %v96 = vld [vmem:[#allocation7 + $0xe0] sm:$0xff]
    %v97 = vld [vmem:[#allocation7 + $0xe8] sm:$0xff]
    %v98 = vld [vmem:[#allocation7 + $0xf0] sm:$0xff]
    %v99 = vld [vmem:[#allocation7 + $0xf8] sm:$0xff]
    %v100 = vmul.f32 %v68, %v68
    %v101 = vmul.f32 %v69, %v69
    %v102 = vmul.f32 %v70, %v70
    %v103 = vmul.f32 %v71, %v71
    %v104 = vmul.f32 %v72, %v72
    %v105 = vmul.f32 %v73, %v73
    %v106 = vmul.f32 %v74, %v74
    %v107 = vmul.f32 %v75, %v75
    %v108 = vmul.f32 %v76, %v76
    %v109 = vmul.f32 %v77, %v77
    %v110 = vmul.f32 %v78, %v78
    %v111 = vmul.f32 %v79, %v79
    %v112 = vmul.f32 %v80, %v80
    %v113 = vmul.f32 %v81, %v81
    %v114 = vmul.f32 %v82, %v82
    %v115 = vmul.f32 %v83, %v83
    %v116 = vmul.f32 %v84, %v84
    %v117 = vmul.f32 %v85, %v85
    %v118 = vmul.f32 %v86, %v86
    %v119 = vmul.f32 %v87, %v87
    %v120 = vmul.f32 %v88, %v88
    %v121 = vmul.f32 %v89, %v89
    %v122 = vmul.f32 %v90, %v90
    %v123 = vmul.f32 %v91, %v91
    %v124 = vmul.f32 %v92, %v92
    %v125 = vmul.f32 %v93, %v93
    %v126 = vmul.f32 %v94, %v94
    %v127 = vmul.f32 %v95, %v95
    %v128 = vmul.f32 %v96, %v96
    %v129 = vmul.f32 %v97, %v97
    %v130 = vmul.f32 %v98, %v98
    %v131 = vmul.f32 %v99, %v99
    %132 = vadd.xlane.f32.xlu0 %v100
    %v133 = vpop.xlane.xlu0 %132
    %134 = vadd.xlane.f32.xlu0 %v101
    %v135 = vpop.xlane.xlu0 %134
    %136 = vadd.xlane.f32.xlu0 %v102
    %v137 = vpop.xlane.xlu0 %136
    %138 = vadd.xlane.f32.xlu0 %v103
    %v139 = vpop.xlane.xlu0 %138
    %140 = vadd.xlane.f32.xlu0 %v104
    %v141 = vpop.xlane.xlu0 %140
    %142 = vadd.xlane.f32.xlu0 %v105
    %v143 = vpop.xlane.xlu0 %142
    %144 = vadd.xlane.f32.xlu0 %v106
    %v145 = vpop.xlane.xlu0 %144
    %146 = vadd.xlane.f32.xlu0 %v107
    %v147 = vpop.xlane.xlu0 %146
    %148 = vadd.xlane.f32.xlu0 %v108
    %v149 = vpop.xlane.xlu0 %148
    %150 = vadd.xlane.f32.xlu0 %v109
    %v151 = vpop.xlane.xlu0 %150
    %152 = vadd.xlane.f32.xlu0 %v110
    %v153 = vpop.xlane.xlu0 %152
    %154 = vadd.xlane.f32.xlu0 %v111
    %v155 = vpop.xlane.xlu0 %154
    %156 = vadd.xlane.f32.xlu0 %v112
    %v157 = vpop.xlane.xlu0 %156
    %158 = vadd.xlane.f32.xlu0 %v113
    %v159 = vpop.xlane.xlu0 %158
    %160 = vadd.xlane.f32.xlu0 %v114
    %v161 = vpop.xlane.xlu0 %160
    %162 = vadd.xlane.f32.xlu0 %v115
    %v163 = vpop.xlane.xlu0 %162
    %164 = vadd.xlane.f32.xlu0 %v116
    %v165 = vpop.xlane.xlu0 %164
    %166 = vadd.xlane.f32.xlu0 %v117
    %v167 = vpop.xlane.xlu0 %166
    %168 = vadd.xlane.f32.xlu0 %v118
    %v169 = vpop.xlane.xlu0 %168
    %170 = vadd.xlane.f32.xlu0 %v119
    %v171 = vpop.xlane.xlu0 %170
    %172 = vadd.xlane.f32.xlu0 %v120
    %v173 = vpop.xlane.xlu0 %172
    %174 = vadd.xlane.f32.xlu0 %v121
    %v175 = vpop.xlane.xlu0 %174
    %176 = vadd.xlane.f32.xlu0 %v122
    %v177 = vpop.xlane.xlu0 %176
    %178 = vadd.xlane.f32.xlu0 %v123
    %v179 = vpop.xlane.xlu0 %178
    %180 = vadd.xlane.f32.xlu0 %v124
    %v181 = vpop.xlane.xlu0 %180
    %182 = vadd.xlane.f32.xlu0 %v125
    %v183 = vpop.xlane.xlu0 %182
    %184 = vadd.xlane.f32.xlu0 %v126
    %v185 = vpop.xlane.xlu0 %184
    %186 = vadd.xlane.f32.xlu0 %v127
    %v187 = vpop.xlane.xlu0 %186
    %188 = vadd.xlane.f32.xlu0 %v128
    %v189 = vpop.xlane.xlu0 %188
    %190 = vadd.xlane.f32.xlu0 %v129
    %v191 = vpop.xlane.xlu0 %190
    %192 = vadd.xlane.f32.xlu0 %v130
    %v193 = vpop.xlane.xlu0 %192
    %194 = vadd.xlane.f32.xlu0 %v131
    %v195 = vpop.xlane.xlu0 %194
    %v196 = vmax.f32 %v133, 1e-24
    %v197 = vmax.f32 %v135, 1e-24
    %v198 = vmax.f32 %v137, 1e-24
    %v199 = vmax.f32 %v139, 1e-24
    %v200 = vmax.f32 %v141, 1e-24
    %v201 = vmax.f32 %v143, 1e-24
    %v202 = vmax.f32 %v145, 1e-24
    %v203 = vmax.f32 %v147, 1e-24
    %v204 = vmax.f32 %v149, 1e-24
    %v205 = vmax.f32 %v151, 1e-24
    %v206 = vmax.f32 %v153, 1e-24
    %v207 = vmax.f32 %v155, 1e-24
    %v208 = vmax.f32 %v157, 1e-24
    %v209 = vmax.f32 %v159, 1e-24
    %v210 = vmax.f32 %v161, 1e-24
    %v211 = vmax.f32 %v163, 1e-24
    %v212 = vmax.f32 %v165, 1e-24
    %v213 = vmax.f32 %v167, 1e-24
    %v214 = vmax.f32 %v169, 1e-24
    %v215 = vmax.f32 %v171, 1e-24
    %v216 = vmax.f32 %v173, 1e-24
    %v217 = vmax.f32 %v175, 1e-24
    %v218 = vmax.f32 %v177, 1e-24
    %v219 = vmax.f32 %v179, 1e-24
    %v220 = vmax.f32 %v181, 1e-24
    %v221 = vmax.f32 %v183, 1e-24
    %v222 = vmax.f32 %v185, 1e-24
    %v223 = vmax.f32 %v187, 1e-24
    %v224 = vmax.f32 %v189, 1e-24
    %v225 = vmax.f32 %v191, 1e-24
    %v226 = vmax.f32 %v193, 1e-24
    %v227 = vmax.f32 %v195, 1e-24
    %v228 = vrsqrt.pop %v196
    %v229 = vrsqrt.pop %v197
    %v230 = vrsqrt.pop %v198
    %v231 = vrsqrt.pop %v199
    %v232 = vrsqrt.pop %v200
    %v233 = vrsqrt.pop %v201
    %v234 = vrsqrt.pop %v202
    %v235 = vrsqrt.pop %v203
    %v236 = vrsqrt.pop %v204
    %v237 = vrsqrt.pop %v205
    %v238 = vrsqrt.pop %v206
    %v239 = vrsqrt.pop %v207
    %v240 = vrsqrt.pop %v208
    %v241 = vrsqrt.pop %v209
    %v242 = vrsqrt.pop %v210
    %v243 = vrsqrt.pop %v211
    %v244 = vrsqrt.pop %v212
    %v245 = vrsqrt.pop %v213
    %v246 = vrsqrt.pop %v214
    %v247 = vrsqrt.pop %v215
    %v248 = vrsqrt.pop %v216
    %v249 = vrsqrt.pop %v217
    %v250 = vrsqrt.pop %v218
    %v251 = vrsqrt.pop %v219
    %v252 = vrsqrt.pop %v220
    %v253 = vrsqrt.pop %v221
    %v254 = vrsqrt.pop %v222
    %v255 = vrsqrt.pop %v223
    %v256 = vrsqrt.pop %v224
    %v257 = vrsqrt.pop %v225
    %v258 = vrsqrt.pop %v226
    %v259 = vrsqrt.pop %v227
    %v260 = vmul.f32 %v68, %v228
    %v261 = vmul.f32 %v69, %v229
    %v262 = vmul.f32 %v70, %v230
    %v263 = vmul.f32 %v71, %v231
    %v264 = vmul.f32 %v72, %v232
    %v265 = vmul.f32 %v73, %v233
    %v266 = vmul.f32 %v74, %v234
    %v267 = vmul.f32 %v75, %v235
    %v268 = vmul.f32 %v76, %v236
    %v269 = vmul.f32 %v77, %v237
    %v270 = vmul.f32 %v78, %v238
    %v271 = vmul.f32 %v79, %v239
    %v272 = vmul.f32 %v80, %v240
    %v273 = vmul.f32 %v81, %v241
    %v274 = vmul.f32 %v82, %v242
    %v275 = vmul.f32 %v83, %v243
    %v276 = vmul.f32 %v84, %v244
    %v277 = vmul.f32 %v85, %v245
    %v278 = vmul.f32 %v86, %v246
    %v279 = vmul.f32 %v87, %v247
    %v280 = vmul.f32 %v88, %v248
    %v281 = vmul.f32 %v89, %v249
    %v282 = vmul.f32 %v90, %v250
    %v283 = vmul.f32 %v91, %v251
    %v284 = vmul.f32 %v92, %v252
    %v285 = vmul.f32 %v93, %v253
    %v286 = vmul.f32 %v94, %v254
    %v287 = vmul.f32 %v95, %v255
    %v288 = vmul.f32 %v96, %v256
    %v289 = vmul.f32 %v97, %v257
    %v290 = vmul.f32 %v98, %v258
    %v291 = vmul.f32 %v99, %v259
    %v292 = vld [vmem:[#allocation2] sm:$0xff]
    %v293 = vld [vmem:[#allocation2 + $0x8] sm:$0xff]
    %294 = vmatprep.subr.mxu0 0.0
    %295 = vmatpush1.xpose.msra.mxu0 %v275
    %296 = vmatprep.subr.mxu0 0.0
    %297 = vmatpush1.xpose.msra.mxu0 %v274
    %298 = vmatprep.subr.mxu0 0.0
    %299 = vmatpush1.xpose.msra.mxu0 %v273
    %300 = vmatprep.subr.mxu0 0.0
    %301 = vmatpush1.xpose.msra.mxu0 %v272
    %302 = vmatprep.subr.mxu0 0.0
    %303 = vmatpush1.xpose.msra.mxu0 %v271
    %304 = vmatprep.subr.mxu0 0.0
    %305 = vmatpush1.xpose.msra.mxu0 %v270
    %306 = vmatprep.subr.mxu0 0.0
    %307 = vmatpush1.xpose.msra.mxu0 %v269
    %308 = vmatprep.subr.mxu0 0.0
    %309 = vmatpush1.xpose.msra.mxu0 %v268
    %310 = vmatprep.subr.mxu0 0.0
    %311 = vmatpush1.xpose.msra.mxu0 %v267
    %312 = vmatprep.subr.mxu0 0.0
    %313 = vmatpush1.xpose.msra.mxu0 %v266
    %314 = vmatprep.subr.mxu0 0.0
    %315 = vmatpush1.xpose.msra.mxu0 %v265
    %316 = vmatprep.subr.mxu0 0.0
    %317 = vmatpush1.xpose.msra.mxu0 %v264
    %318 = vmatprep.subr.mxu0 0.0
    %319 = vmatpush1.xpose.msra.mxu0 %v263
    %320 = vmatprep.subr.mxu0 0.0
    %321 = vmatpush1.xpose.msra.mxu0 %v262
    %322 = vmatprep.subr.mxu0 0.0
    %323 = vmatpush1.xpose.msra.mxu0 %v261
    %324 = vmatprep.subr.mxu0 0.0
    %325 = vmatpush1.xpose.msra.mxu0 %v260
    %326 = vmatprep.subr.mxu0 0.0
    %327 = vmatpush2.xpose.msra.mxu0 %v291
    %328 = vmatprep.subr.mxu0 0.0
    %329 = vmatpush2.xpose.msra.mxu0 %v290
    %330 = vmatprep.subr.mxu0 0.0
    %331 = vmatpush2.xpose.msra.mxu0 %v289
    %332 = vmatprep.subr.mxu0 0.0
    %333 = vmatpush2.xpose.msra.mxu0 %v288
    %334 = vmatprep.subr.mxu0 0.0
    %335 = vmatpush2.xpose.msra.mxu0 %v287
    %336 = vmatprep.subr.mxu0 0.0
    %337 = vmatpush2.xpose.msra.mxu0 %v286
    %338 = vmatprep.subr.mxu0 0.0
    %339 = vmatpush2.xpose.msra.mxu0 %v285
    %340 = vmatprep.subr.mxu0 0.0
    %341 = vmatpush2.xpose.msra.mxu0 %v284
    %342 = vmatprep.subr.mxu0 0.0
    %343 = vmatpush2.xpose.msra.mxu0 %v283
    %344 = vmatprep.subr.mxu0 0.0
    %345 = vmatpush2.xpose.msra.mxu0 %v282
    %346 = vmatprep.subr.mxu0 0.0
    %347 = vmatpush2.xpose.msra.mxu0 %v281
    %348 = vmatprep.subr.mxu0 0.0
    %349 = vmatpush2.xpose.msra.mxu0 %v280
    %350 = vmatprep.subr.mxu0 0.0
    %351 = vmatpush2.xpose.msra.mxu0 %v279
    %352 = vmatprep.subr.mxu0 0.0
    %353 = vmatpush2.xpose.msra.mxu0 %v278
    %354 = vmatprep.subr.mxu0 0.0
    %355 = vmatpush2.xpose.msra.mxu0 %v277
    %356 = vmatprep.subr.mxu0 0.0
    %357 = vmatpush2.xpose.msra.mxu0 %v276
    %358 = vmatprep.mubr.f32.mxu0 0.0
    %359 = vmatmul.mubr.f32.gmra.mxu0 %v292
    %v360 = vpop.f32.mrf.mxu0
    %v361 = vadd.f32 0.0, %v360
    %v362 = vpop.f32.mrf.mxu0
    %v363 = vadd.f32 0.0, %v362
    %364 = vmatprep.mubr.f32.mxu0 0.0
    %365 = vmatmul.mubr.f32.gmra.mxu0 %v293
    %v366 = vpop.f32.mrf.mxu0
    %v367 = vadd.f32 0.0, %v366
    %v368 = vpop.f32.mrf.mxu0
    %v369 = vadd.f32 0.0, %v368
    %370 = vdwg.mxu0
    %v371 = vmul.f32 %v361, %v361
    %v372 = vmul.f32 %v363, %v363
    %v373 = vsub.f32 1.0, %v371
    %v374 = vsub.f32 1.0, %v372
    %v375 = vmax.f32 %v373, 0.0
    %v376 = vmax.f32 %v374, 0.0
    %v377 = vmin.f32 %v375, 1.0
    %v378 = vmin.f32 %v376, 1.0
    %v379 = vrsqrt.pop %v377
    %v380 = vmul.f32 %v377, %v379
    %vm381 = vcmp.eq.f32.partialorder %v377, inf
    %v382 = vsel %vm381, %v377, %v380
    %vm383 = vcmp.eq.f32.partialorder %v377, 0.0
    %v384 = vand.u32 %v377, 2147483648
    %v385 = vsel %vm383, %v384, %v382
    %v386 = vrsqrt.pop %v378
    %v387 = vmul.f32 %v378, %v386
    %vm388 = vcmp.eq.f32.partialorder %v378, inf
    %v389 = vsel %vm388, %v378, %v387
    %vm390 = vcmp.eq.f32.partialorder %v378, 0.0
    %v391 = vand.u32 %v378, 2147483648
    %v392 = vsel %vm390, %v391, %v389
    %v393 = vmul.f32 %v361, 0.87758255
    %v394 = vmul.f32 %v363, 0.87758255
    %v395 = vmul.f32 %v385, 0.47942555
    %v396 = vmul.f32 %v392, 0.47942555
    %v397 = vsub.f32 %v393, %v395
    %v398 = vsub.f32 %v394, %v396
    %vm399 = vcmp.gt.f32.partialorder %v361, -0.87758255
    %vm400 = vcmp.gt.f32.partialorder %v363, -0.87758255
    %v401 = vsub.f32 %v361, 0.23971277
    %v402 = vsub.f32 %v363, 0.23971277
    %v403 = vsel %vm399, %v397, %v401
    %v404 = vsel %vm400, %v398, %v402
    %v405 = vld [vmem:[%s0] sm:$0xff]
    %v406 = vlaneseq
    %v407 = vand.u32 %v406, 127
    %v408 = vadd.s32 %v407, 128
    %s409 = smul.u32 0, 256
    %v410 = vstv %s409
    %v411 = vadd.s32 %v407, %v410
    %v412 = vadd.s32 %v408, %v410
    %413 = vset.pattern.permute.xlu0 0
    %414 = vperm.xlu0 %413, %v405
    %v415 = vpop.permute.xlu0 %414
    %vm416 = vcmp.eq.s32.totalorder %v411, %v415
    %vm417 = vcmp.eq.s32.totalorder %v412, %v415
    %v418 = vsel %vm416, %v403, %v361
    %v419 = vsel %vm417, %v404, %v363
    %v420 = vmul.f32 %v418, 30.0
    %v421 = vmul.f32 %v419, 30.0
    %422 = vst [vmem:[#allocation9] sm:$0xff] %v420
    %423 = vst [vmem:[#allocation9 + $0x8] sm:$0xff] %v421
    %v424 = vmul.f32 %v367, 2.0
    %v425 = vmul.f32 %v369, 2.0
    %v426 = vsub.f32 2.0, %v424
    %v427 = vsub.f32 2.0, %v425
    %vm428 = vcmp.lt.s32.totalorder %v411, 256
    %vm429 = vcmp.lt.s32.totalorder %v412, 256
    %vm430 = vmxor %vm416, 1
    %vm431 = vmxor %vm417, 1
    %vm432 = vmand %vm428, %vm430
    %vm433 = vmand %vm429, %vm431
    %v434 = vsel %vm432, %v426, 1000.0
    %v435 = vsel %vm433, %v427, 1000.0
    %v436 = vld [vmem:[#allocation3] sm:$0xff]
    %v437 = vmin.f32 %v434, %v435
    %438 = vmin.xlane.f32.xlu0 %v437
    %v439 = vpop.xlane.xlu0 %438
    %v440 = vmin.f32 %v436, %v439
    %vm441 = vcmask 7168
    %442 = vst.msk [vmem:[#allocation3] sm:$0xff] %vm441, %v440
    // Predicated region
    $region26: #{tpu_custom_call.1} parent=1 // pred_check
      %p443 = pneg %p46
    $region27: #{tpu_custom_call.1} parent=1 // pred_check_branch
      %445 = sbr.rel (%p443) target = $region29
    $region28: #{tpu_custom_call.1} parent=1 // pred_region
      %v446 = vld [vmem:[#allocation3] sm:$0xff]
      %v447 = vsel %vm441, %v446, 0.0
      %448 = vadd.xlane.f32.xlu0 %v447
      %v449 = vpop.xlane.xlu0 %448
      %v450 = vrot.slane %v449, 4
      %v451 = vadd.f32 %v449, %v450
      %v452 = vrot.slane %v451, 2
      %v453 = vadd.f32 %v451, %v452
      %v454 = vrot.slane %v453, 1
      %v455 = vadd.f32 %v453, %v454
      %s456 = vtos %v455
      %v457 = vstv %s456
      %v458 = vrcp.pop %v457
      %s459 = vtos %v458
      %s460 = smul.f32 8.0, %s459
      %v461 = vstv %s460
      %vm462 = vcmask 0
      %463 = vst.msk [vmem:[#allocation10] sm:$0x1] %vm462, %v461
    $region29: #{tpu_custom_call.1} parent=1 // pred_fallthru
      _
    // Predicated region
    $region30: #{tpu_custom_call.1} parent=1 // pred_check
      _
    $region31: #{tpu_custom_call.1} parent=1 // pred_check_branch
      %465 = sbr.rel (0) target = $region33
    $region32: #{tpu_custom_call.1} parent=1 // pred_region
      %s467 = ssub.s32 256, 256
      %468 = vsyncadd [#allocation6], %s467
      %s470 = sshll.u32 [#allocation9], 4
      %s471 = int_to_ptr.vmem [resolvable:$true] %s470
      %473 = dma.vmem_to_hbm [thread:$0]  %s471, 256, %s3, [#allocation6]
    $region33: #{tpu_custom_call.1} parent=1 // pred_fallthru
      _
    // Predicated region
    $region34: #{tpu_custom_call.1} parent=1 // pred_check
      _
    $region35: #{tpu_custom_call.1} parent=1 // pred_check_branch
      %475 = sbr.rel (0) target = $region37
    $region36: #{tpu_custom_call.1} parent=1 // pred_region
      %s477 = ssub.s32 16, 16
      %478 = vsyncadd [#allocation11], %s477
      %s480 = sshll.u32 [#allocation10], 4
      %s481 = int_to_ptr.vmem [resolvable:$true] %s480
      %483 = dma.vmem_to_hbm [thread:$0]  %s481, 16, %s4, [#allocation11]
    $region37: #{tpu_custom_call.1} parent=1 // pred_fallthru
      _
    // Predicated region
    $region38: #{tpu_custom_call.1} parent=1 // pred_check
      _
    $region39: #{tpu_custom_call.1} parent=1 // pred_check_branch
      %485 = sbr.rel (0) target = $region41
    $region40: #{tpu_custom_call.1} parent=1 // pred_region
      %486 = dma.done [#allocation6], 256
    $region41: #{tpu_custom_call.1} parent=1 // pred_fallthru
      _
    // Predicated region
    $region42: #{tpu_custom_call.1} parent=1 // pred_check
      _
    $region43: #{tpu_custom_call.1} parent=1 // pred_check_branch
      %488 = sbr.rel (0) target = $region45
    $region44: #{tpu_custom_call.1} parent=1 // pred_region
      %489 = dma.done [#allocation11], 16
    $region45: #{tpu_custom_call.1} parent=1 // pred_fallthru
      _
    %490 = vsyncpa [#allocation5], 1
    %491 = vsyncpa [#allocation8], 1
    %492 = vsyncpa [#allocation6], 1
    %493 = vsyncpa [#allocation11], 1

</llo_original>
